<compile_context>
chip_gen: v6e
topology: v6e:2x2x1
jax: 0.10.0
libtpu: 0.0.40
codegen_flags: <defaults>
</compile_context>

<pallas_src>
import math
import jax
import jax.numpy as jnp
from jax.experimental import pallas as pl
from jax.experimental.pallas import tpu as pltpu


def _round_up(x, m):
    return ((x + m - 1) // m) * m


def _mlp_kernel(x_ref, w1_ref, b1_ref, w2_ref, b2_ref, o_ref):
    # First linear: (tb, D_in)bf16 @ (D_in, H)bf16 -> f32 accumulator (MXU).
    h = jnp.dot(x_ref[...], w1_ref[...], preferred_element_type=jnp.float32)
    h = h + b1_ref[...]                       # f32 bias add (VPU)
    # Dropout(p=0.2) -> identity in eval mode.
    # LeakyReLU(negative_slope=0.01) == max(x, 0.01*x) for slope in (0, 1).
    h = jnp.maximum(h, 0.01 * h)
    # Second linear: cast the f32 activation to bf16 only for the MXU LHS.
    out = jnp.dot(h.astype(w2_ref.dtype), w2_ref[...],
                  preferred_element_type=jnp.float32)
    out = out + b2_ref[...]                   # f32 bias add
    o_ref[...] = out.astype(o_ref.dtype)


def mlp_forward(x, w1, b1, w2, b2, *, tile_b=None, out_dtype=jnp.float32):
    """x: (B, D_in); w1: (D_in, H); b1: (1, H); w2: (H, D_out); b2: (1, D_out).

    Weights are stored transposed relative to PyTorch's (out_features, in_features)
    so the kernel performs plain x @ W.
    """
    B, D_in = x.shape
    H = w1.shape[1]
    D_out = w2.shape[1]

    # --- Lane-dense output: pad D_out up to a multiple of 128 lanes. ---------
    D_out_p = _round_up(max(D_out, 128), 128)
    if D_out_p != D_out:
        w2 = jnp.pad(w2, ((0, 0), (0, D_out_p - D_out)))
        b2 = jnp.pad(b2, ((0, 0), (0, D_out_p - D_out)))

    # --- Row tile: one grid step for small batches, 256-row tiles for big. ---
    if tile_b is None:
        tile_b = B if B <= 256 else 256
    B_p = _round_up(B, tile_b)
    if B_p != B:
        x = jnp.pad(x, ((0, B_p - B), (0, 0)))
    grid = (B_p // tile_b,)

    # --- bf16 matmul operands, f32 biases. -----------------------------------
    x_bf = x.astype(jnp.bfloat16)
    w1_bf = w1.astype(jnp.bfloat16)
    w2_bf = w2.astype(jnp.bfloat16)
    b1_f32 = b1.astype(jnp.float32)
    b2_f32 = b2.astype(jnp.float32)

    # --- VMEM budget: resident weights + double-buffered x / out tiles. ------
    vmem_est = (
        2 * (tile_b * D_in * 2 + tile_b * D_out_p * 4)          # x / out tiles (x2 buf)
        + 2 * (D_in * H * 2 + H * D_out_p * 2 + H * 4 + D_out_p * 4)  # weights + biases
        + (2 << 20)                                             # headroom
    )
    cp_kwargs = dict(dimension_semantics=("parallel",))
    if vmem_est > (32 << 20):
        # Raise the scoped limit, but stay under v7x's 64 MiB physical VMEM.
        cp_kwargs["vmem_limit_bytes"] = min(vmem_est, 60 << 20)
    compiler_params = pltpu.CompilerParams(**cp_kwargs)

    out_padded = pl.pallas_call(
        _mlp_kernel,
        out_shape=jax.ShapeDtypeStruct((B_p, D_out_p), out_dtype),
        grid_spec=pltpu.PrefetchScalarGridSpec(
            num_scalar_prefetch=0,
            grid=grid,
            in_specs=[
                pl.BlockSpec((tile_b, D_in), lambda i: (i, 0)),   # x row tile
                pl.BlockSpec((D_in, H), lambda i: (0, 0)),        # W1 (resident)
                pl.BlockSpec((1, H), lambda i: (0, 0)),           # b1 (resident)
                pl.BlockSpec((H, D_out_p), lambda i: (0, 0)),     # W2 (resident)
                pl.BlockSpec((1, D_out_p), lambda i: (0, 0)),     # b2 (resident)
            ],
            out_specs=pl.BlockSpec((tile_b, D_out_p), lambda i: (i, 0)),
        ),
        compiler_params=compiler_params,
    )(x_bf, w1_bf, b1_f32, w2_bf, b2_f32)

    # Slice away the batch / lane padding.
    return out_padded[:B, :D_out]


def init_params(key, in_size, hid_size, out_size):
    """Deterministic init mimicking PyTorch nn.Linear defaults (uniform +/- 1/sqrt(fan_in))."""
    k1, k2, k3, k4 = jax.random.split(key, 4)
    bound1 = 1.0 / math.sqrt(in_size)
    bound2 = 1.0 / math.sqrt(hid_size)
    # Stored transposed relative to PyTorch's (out_features, in_features).
    w1 = jax.random.uniform(k1, (in_size, hid_size), jnp.float32, -bound1, bound1)
    b1 = jax.random.uniform(k2, (1, hid_size), jnp.float32, -bound1, bound1)
    w2 = jax.random.uniform(k3, (hid_size, out_size), jnp.float32, -bound2, bound2)
    b2 = jax.random.uniform(k4, (1, out_size), jnp.float32, -bound2, bound2)
    return w1, b1, w2, b2


def reference_forward_f32(x, w1, b1, w2, b2):
    """Exact f32 reference (PyTorch eval-mode semantics)."""
    h = x @ w1 + b1
    h = jnp.maximum(h, 0.01 * h)
    return h @ w2 + b2


def reference_forward_bf16(x, w1, b1, w2, b2):
    """Reference that mirrors the kernel's bf16-operand / f32-accumulate math."""
    xb = x.astype(jnp.bfloat16)
    w1b = w1.astype(jnp.bfloat16)
    w2b = w2.astype(jnp.bfloat16)
    h = jnp.dot(xb, w1b, preferred_element_type=jnp.float32) + b1
    h = jnp.maximum(h, 0.01 * h)
    out = jnp.dot(h.astype(jnp.bfloat16), w2b, preferred_element_type=jnp.float32) + b2
    return out


if __name__ == "__main__":
    # Small shapes consistent with the module: a batch of BERT embeddings
    # through the default-config head (hid_size=64).
    B, IN_SIZE, HID_SIZE, OUT_SIZE = 8, 32, 64, 16

    key = jax.random.PRNGKey(0)
    k_x, k_p = jax.random.split(key)
    x = jax.random.normal(k_x, (B, IN_SIZE), jnp.float32)
    w1, b1, w2, b2 = init_params(k_p, IN_SIZE, HID_SIZE, OUT_SIZE)

    out = mlp_forward(x, w1, b1, w2, b2)
    out = jax.block_until_ready(out)
    assert out.shape == (B, OUT_SIZE)

    # Tight check against a reference performing identical bf16/f32 arithmetic.
    ref_bf16 = reference_forward_bf16(x, w1, b1, w2, b2)
    assert jnp.allclose(out, ref_bf16, atol=1e-4, rtol=1e-4)

    # Loose check against the exact f32 module semantics (bf16 rounding noise).
    ref_f32 = reference_forward_f32(x, w1, b1, w2, b2)
    assert jnp.allclose(out, ref_f32, atol=2e-2, rtol=2e-2)

    print("KERNEL_OK")
</pallas_src>

<mosaic_0001>
module attributes {stable_mosaic.version = 11 : i64} {
  func.func @_mlp_kernel(%arg0: i32, %arg1: memref<8x32xbf16, #tpu.memory_space<vmem>>, %arg2: memref<32x64xbf16, #tpu.memory_space<vmem>>, %arg3: memref<1x64xf32, #tpu.memory_space<vmem>>, %arg4: memref<64x128xbf16, #tpu.memory_space<vmem>>, %arg5: memref<1x128xf32, #tpu.memory_space<vmem>>, %arg6: memref<8x128xf32, #tpu.memory_space<vmem>>) attributes {dimension_semantics = [#tpu.dimension_semantics<parallel>], iteration_bounds = array<i64: 1>, scalar_prefetch = 0 : i64, scratch_operands = 0 : i64, tpu.core_type = #tpu.core_type<tc>, window_params = [{transform_indices = @transform_0, window_bounds = array<i64: 8, 32>}, {pipeline_mode = #tpu.pipeline_mode<synchronous>, transform_indices = @transform_1, window_bounds = array<i64: 32, 64>}, {pipeline_mode = #tpu.pipeline_mode<synchronous>, transform_indices = @transform_2, window_bounds = array<i64: 1, 64>}, {pipeline_mode = #tpu.pipeline_mode<synchronous>, transform_indices = @transform_3, window_bounds = array<i64: 64, 128>}, {pipeline_mode = #tpu.pipeline_mode<synchronous>, transform_indices = @transform_4, window_bounds = array<i64: 1, 128>}, {transform_indices = @transform_5, window_bounds = array<i64: 8, 128>}]} {
    %c0 = arith.constant 0 : index
    %c0_0 = arith.constant 0 : index
    %0 = vector.load %arg1[%c0, %c0_0] : memref<8x32xbf16, #tpu.memory_space<vmem>>, vector<8x32xbf16>
    %c0_1 = arith.constant 0 : index
    %c0_2 = arith.constant 0 : index
    %1 = vector.load %arg2[%c0_1, %c0_2] : memref<32x64xbf16, #tpu.memory_space<vmem>>, vector<32x64xbf16>
    %cst = arith.constant dense<0.000000e+00> : vector<8x64xf32>
    %2 = tpu.matmul %0, %1, %cst {dimension_numbers = #tpu.dot_dimension_numbers<[1], [0], [0], [1], [0, 0, 1, 1], [], []>} : vector<8x32xbf16>, vector<32x64xbf16>, vector<8x64xf32> -> vector<8x64xf32>
    %c0_3 = arith.constant 0 : index
    %c0_4 = arith.constant 0 : index
    %3 = vector.load %arg3[%c0_3, %c0_4] : memref<1x64xf32, #tpu.memory_space<vmem>>, vector<1x64xf32>
    %4 = vector.broadcast %3 : vector<1x64xf32> to vector<8x64xf32>
    %5 = arith.addf %2, %4 : vector<8x64xf32>
    %cst_5 = arith.constant 0.00999999977 : f32
    %6 = vector.broadcast %cst_5 : f32 to vector<8x64xf32>
    %7 = arith.mulf %6, %5 : vector<8x64xf32>
    %8 = arith.maximumf %5, %7 : vector<8x64xf32>
    %9 = arith.truncf %8 : vector<8x64xf32> to vector<8x64xbf16>
    %c0_6 = arith.constant 0 : index
    %c0_7 = arith.constant 0 : index
    %10 = vector.load %arg4[%c0_6, %c0_7] : memref<64x128xbf16, #tpu.memory_space<vmem>>, vector<64x128xbf16>
    %cst_8 = arith.constant dense<0.000000e+00> : vector<8x128xf32>
    %11 = tpu.matmul %9, %10, %cst_8 {dimension_numbers = #tpu.dot_dimension_numbers<[1], [0], [0], [1], [0, 0, 1, 1], [], []>} : vector<8x64xbf16>, vector<64x128xbf16>, vector<8x128xf32> -> vector<8x128xf32>
    %c0_9 = arith.constant 0 : index
    %c0_10 = arith.constant 0 : index
    %12 = vector.load %arg5[%c0_9, %c0_10] : memref<1x128xf32, #tpu.memory_space<vmem>>, vector<1x128xf32>
    %13 = vector.broadcast %12 : vector<1x128xf32> to vector<8x128xf32>
    %14 = arith.addf %11, %13 : vector<8x128xf32>
    %c0_11 = arith.constant 0 : index
    %c0_12 = arith.constant 0 : index
    %15 = vector.load %arg6[%c0_11, %c0_12] : memref<8x128xf32, #tpu.memory_space<vmem>>, vector<8x128xf32>
    tpu.vector_store %arg6[%c0_11, %c0_12], %14 {strides = array<i32>} : memref<8x128xf32, #tpu.memory_space<vmem>>, vector<8x128xf32>,
    return
  }
  func.func @transform_0(%arg0: i32) -> (i32, i32) {
    %c0_i32 = arith.constant 0 : i32
    %c0_i32_0 = arith.constant 0 : i32
    return %arg0, %c0_i32 : i32, i32
  }
  func.func @transform_1(%arg0: i32) -> (i32, i32) {
    %c0_i32 = arith.constant 0 : i32
    %c0_i32_0 = arith.constant 0 : i32
    %c0_i32_1 = arith.constant 0 : i32
    return %c0_i32, %c0_i32_0 : i32, i32
  }
  func.func @transform_2(%arg0: i32) -> (i32, i32) {
    %c0_i32 = arith.constant 0 : i32
    %c0_i32_0 = arith.constant 0 : i32
    %c0_i32_1 = arith.constant 0 : i32
    return %c0_i32, %c0_i32_0 : i32, i32
  }
  func.func @transform_3(%arg0: i32) -> (i32, i32) {
    %c0_i32 = arith.constant 0 : i32
    %c0_i32_0 = arith.constant 0 : i32
    %c0_i32_1 = arith.constant 0 : i32
    return %c0_i32, %c0_i32_0 : i32, i32
  }
  func.func @transform_4(%arg0: i32) -> (i32, i32) {
    %c0_i32 = arith.constant 0 : i32
    %c0_i32_0 = arith.constant 0 : i32
    %c0_i32_1 = arith.constant 0 : i32
    return %c0_i32, %c0_i32_0 : i32, i32
  }
  func.func @transform_5(%arg0: i32) -> (i32, i32) {
    %c0_i32 = arith.constant 0 : i32
    %c0_i32_0 = arith.constant 0 : i32
    return %arg0, %c0_i32 : i32, i32
  }
}

</mosaic_0001>

<llo_original>
// kernel: tpu_custom_call.1
$region0: #{tpu_custom_call.1}
  #allocation0 [shape = 'u32[]', space=smem, size = 0x4, offset = 0x4, fixed_abs, tag = 'smem constant byte address 0x4 - core index']
  #allocation1 [shape = 'u32[144,128]{1,0:T(1,128)}', space=vmem, size = 0x12000, scoped, tag = 'internal scratch']
  %s0 = inlined_call_operand.hbm [shape: bf16[8,32], index: 0, kind: input, shape index: {}]
  %s1 = inlined_call_operand.hbm [shape: bf16[32,64], index: 1, kind: input, shape index: {}]
  %s2 = inlined_call_operand.vmem [shape: f32[1,64], index: 2, kind: input, shape index: {}]
  %s3 = inlined_call_operand.hbm [shape: bf16[64,128], index: 3, kind: input, shape index: {}]
  %s4 = inlined_call_operand.vmem [shape: f32[1,128], index: 4, kind: input, shape index: {}]
  %s5 = inlined_call_operand.hbm [shape: f32[8,128], index: 5, kind: output, shape index: {}]
  %s6 = sld [smem:[#allocation0]]
  $region42: #{tpu_custom_call.1} parent=0
    _
  %s8 = ssub.s32 1, %s6
  %s9 = scalar_select 0, %s8, %s6
  $region1: #{tpu_custom_call.1} parent=0
    #allocation2 [shape = 'u8[2048]{0}', space=vmem, size = 0x800, scoped, tag = 'input window, operand 0, single buffered']
    #allocation3 [shape = 's32[1]{0}', space=sflag, size = 0x4, scoped, tag = 'scoped memory for tpu_custom_call.1']
    #allocation4 [shape = 's32[1]{0}', space=sflag, size = 0x4, scoped, tag = 'scoped memory for tpu_custom_call.1']
    #allocation5 [shape = 'u8[8192]{0}', space=vmem, size = 0x2000, scoped, tag = 'input window, operand 1, single buffered']
    #allocation6 [shape = 's32[1]{0}', space=sflag, size = 0x4, scoped, tag = 'scoped memory for tpu_custom_call.1']
    #allocation7 [shape = 'u8[16384]{0}', space=vmem, size = 0x4000, scoped, tag = 'input window, operand 3, single buffered']
    #allocation8 [shape = 'u8[4096]{0}', space=vmem, size = 0x1000, scoped, tag = 'output window, operand 0, single buffered']
    %10 = vsyncpa [#allocation3], 0
    %11 = vsyncpa [#allocation6], 0
    %12 = vsyncpa [#allocation4], 0
    // Predicated region
    $region2: #{tpu_custom_call.1} parent=1 // pred_check
      _
    $region3: #{tpu_custom_call.1} parent=1 // pred_check_branch
      %14 = sbr.rel (0) target = $region5
    $region4: #{tpu_custom_call.1} parent=1 // pred_region
      %s16 = ssub.s32 64, 64
      %17 = vsyncadd [#allocation3], %s16
      %s19 = sshll.u32 [#allocation2], 4
      %s20 = int_to_ptr.vmem [resolvable:$true] %s19
      %22 = dma.hbm_to_vmem [thread:$0]  %s0, 64, %s20, [#allocation3]
    $region5: #{tpu_custom_call.1} parent=1 // pred_fallthru
      _
    // Predicated region
    $region6: #{tpu_custom_call.1} parent=1 // pred_check
      _
    $region7: #{tpu_custom_call.1} parent=1 // pred_check_branch
      %24 = sbr.rel (0) target = $region9
    $region8: #{tpu_custom_call.1} parent=1 // pred_region
      %s26 = ssub.s32 256, 256
      %27 = vsyncadd [#allocation6], %s26
      %s28 = sshll.u32 [#allocation5], 4
      %s29 = int_to_ptr.vmem [resolvable:$true] %s28
      %34 = dma.hbm_to_vmem [thread:$0]  %s1, 256, %s29, [#allocation6], 64, 64, 4
    $region9: #{tpu_custom_call.1} parent=1 // pred_fallthru
      _
    // Predicated region
    $region10: #{tpu_custom_call.1} parent=1 // pred_check
      _
    $region11: #{tpu_custom_call.1} parent=1 // pred_check_branch
      %36 = sbr.rel (0) target = $region13
    $region12: #{tpu_custom_call.1} parent=1 // pred_region
      _
    $region13: #{tpu_custom_call.1} parent=1 // pred_fallthru
      _
    // Predicated region
    $region14: #{tpu_custom_call.1} parent=1 // pred_check
      _
    $region15: #{tpu_custom_call.1} parent=1 // pred_check_branch
      %38 = sbr.rel (0) target = $region17
    $region16: #{tpu_custom_call.1} parent=1 // pred_region
      %s40 = ssub.s32 512, 512
      %41 = vsyncadd [#allocation6], %s40
      %s42 = sshll.u32 [#allocation7], 4
      %s43 = int_to_ptr.vmem [resolvable:$true] %s42
      %48 = dma.hbm_to_vmem [thread:$0]  %s3, 512, %s43, [#allocation6], 64, 64, 4
    $region17: #{tpu_custom_call.1} parent=1 // pred_fallthru
      _
    // Predicated region
    $region18: #{tpu_custom_call.1} parent=1 // pred_check
      _
    $region19: #{tpu_custom_call.1} parent=1 // pred_check_branch
      %50 = sbr.rel (0) target = $region21
    $region20: #{tpu_custom_call.1} parent=1 // pred_region
      _
    $region21: #{tpu_custom_call.1} parent=1 // pred_fallthru
      _
    // Predicated region
    $region22: #{tpu_custom_call.1} parent=1 // pred_check
      _
    $region23: #{tpu_custom_call.1} parent=1 // pred_check_branch
      %52 = sbr.rel (0) target = $region25
    $region24: #{tpu_custom_call.1} parent=1 // pred_region
      %53 = dma.done [#allocation3], 64
    $region25: #{tpu_custom_call.1} parent=1 // pred_fallthru
      _
    // Predicated region
    $region26: #{tpu_custom_call.1} parent=1 // pred_check
      _
    $region27: #{tpu_custom_call.1} parent=1 // pred_check_branch
      %55 = sbr.rel (0) target = $region29
    $region28: #{tpu_custom_call.1} parent=1 // pred_region
      %56 = dma.done [#allocation6], 256
    $region29: #{tpu_custom_call.1} parent=1 // pred_fallthru
      _
    // Predicated region
    $region30: #{tpu_custom_call.1} parent=1 // pred_check
      _
    $region31: #{tpu_custom_call.1} parent=1 // pred_check_branch
      %58 = sbr.rel (0) target = $region33
    $region32: #{tpu_custom_call.1} parent=1 // pred_region
      %59 = dma.done [#allocation6], 512
    $region33: #{tpu_custom_call.1} parent=1 // pred_fallthru
      _
    %v61 = vld [vmem:[#allocation2] sm:$0xf]
    %v62 = vld [vmem:[#allocation5] sm:$0xf]
    %v63 = vld [vmem:[#allocation5 + $0x4] sm:$0xf]
    %v64 = vld [vmem:[#allocation5 + $0x8] sm:$0xf]
    %v65 = vld [vmem:[#allocation5 + $0xc] sm:$0xf]
    %v66 = vld [vmem:[%s2] sm:$0x1]
    %v68 = vlaneseq
    %v69 = vshrl.u32 %v68, 7
    %v70 = vsub.s32 0, %v69
    %v71 = vrot.slane %v66, %v70
    %v77 = vunpack.c.l.b16 %v62
    %v78 = vunpack.c.l.b16 %v63
    %v79 = vunpack.c.l.b16 %v64
    %v80 = vunpack.c.l.b16 %v65
    %v81 = vpack.c.b16 %v78, %v77
    %v82 = vpack.c.b16 %v80, %v79
    %vm85 = vcmask 261120
    %v87 = vsel %vm85, %v61, 0
    %89 = vmatprep.subr.bf16.mxu0 0
    %90 = vmatpush1.bf16.msra.mxu0 0
    %91 = vmatprep.subr.bf16.mxu0 0
    %92 = vmatpush1.bf16.msra.mxu0 0
    %93 = vmatprep.subr.bf16.mxu0 0
    %94 = vmatpush1.bf16.msra.mxu0 0
    %95 = vmatprep.subr.bf16.mxu0 0
    %96 = vmatpush1.bf16.msra.mxu0 0
    %97 = vmatprep.subr.bf16.mxu0 0
    %98 = vmatpush1.bf16.msra.mxu0 0
    %99 = vmatprep.subr.bf16.mxu0 0
    %100 = vmatpush1.bf16.msra.mxu0 0
    %101 = vmatprep.subr.bf16.mxu0 0
    %102 = vmatpush1.bf16.msra.mxu0 %v82
    %103 = vmatprep.subr.bf16.mxu0 0
    %104 = vmatpush1.bf16.msra.mxu0 %v81
    %105 = vmatprep.subr.bf16.mxu0 0
    %106 = vmatpush2.bf16.msra.mxu0 0
    %107 = vmatprep.subr.bf16.mxu0 0
    %108 = vmatpush2.bf16.msra.mxu0 0
    %109 = vmatprep.subr.bf16.mxu0 0
    %110 = vmatpush2.bf16.msra.mxu0 0
    %111 = vmatprep.subr.bf16.mxu0 0
    %112 = vmatpush2.bf16.msra.mxu0 0
    %113 = vmatprep.subr.bf16.mxu0 0
    %114 = vmatpush2.bf16.msra.mxu0 0
    %115 = vmatprep.subr.bf16.mxu0 0
    %116 = vmatpush2.bf16.msra.mxu0 0
    %117 = vmatprep.subr.bf16.mxu0 0
    %118 = vmatpush2.bf16.msra.mxu0 0
    %119 = vmatprep.subr.bf16.mxu0 0
    %120 = vmatpush2.bf16.msra.mxu0 0
    %121 = vmatprep.mubr.bf16.mxu0 0
    %122 = vmatmul.mubr.bf16.gmra.mxu0 %v87
    %v123 = vpop.f32.mrf.mxu0
    %v124 = vadd.f32 %v71, %v123
    %v125 = vpop.f32.mrf.mxu0
    %v126 = vpop.f32.mrf.mxu0
    %v127 = vpop.f32.mrf.mxu0
    %128 = vdwg.mxu0
    %v129 = vmul.f32 %v124, 0.01
    %v130 = vmax.f32 %v124, %v129
    %v131 = vpack.c.bf16 %v130, %v130
    %v132 = vld [vmem:[#allocation7] sm:$0xf]
    %v133 = vld [vmem:[#allocation7 + $0x4] sm:$0xf]
    %v134 = vld [vmem:[#allocation7 + $0x8] sm:$0xf]
    %v135 = vld [vmem:[#allocation7 + $0xc] sm:$0xf]
    %v136 = vld [vmem:[#allocation7 + $0x10] sm:$0xf]
    %v137 = vld [vmem:[#allocation7 + $0x14] sm:$0xf]
    %v138 = vld [vmem:[#allocation7 + $0x18] sm:$0xf]
    %v139 = vld [vmem:[#allocation7 + $0x1c] sm:$0xf]
    %v140 = vld [vmem:[%s4] sm:$0x1]
    %v142 = vlaneseq
    %v143 = vshrl.u32 %v142, 7
    %v144 = vsub.s32 0, %v143
    %v145 = vrot.slane %v140, %v144
    %v155 = vunpack.c.l.b16 %v132
    %v156 = vunpack.c.l.b16 %v133
    %v157 = vunpack.c.l.b16 %v134
    %v158 = vunpack.c.l.b16 %v135
    %v159 = vunpack.c.l.b16 %v136
    %v160 = vunpack.c.l.b16 %v137
    %v161 = vunpack.c.l.b16 %v138
    %v162 = vunpack.c.l.b16 %v139
    %v163 = vpack.c.b16 %v156, %v155
    %v164 = vpack.c.b16 %v158, %v157
    %v165 = vpack.c.b16 %v160, %v159
    %v166 = vpack.c.b16 %v162, %v161
    %vm171 = vcmask 523264
    %v173 = vsel %vm171, %v131, 0
    %175 = vmatprep.subr.bf16.mxu0 0
    %176 = vmatpush1.bf16.msra.mxu0 0
    %177 = vmatprep.subr.bf16.mxu0 0
    %178 = vmatpush1.bf16.msra.mxu0 0
    %179 = vmatprep.subr.bf16.mxu0 0
    %180 = vmatpush1.bf16.msra.mxu0 0
    %181 = vmatprep.subr.bf16.mxu0 0
    %182 = vmatpush1.bf16.msra.mxu0 0
    %183 = vmatprep.subr.bf16.mxu0 0
    %184 = vmatpush1.bf16.msra.mxu0 %v166
    %185 = vmatprep.subr.bf16.mxu0 0
    %186 = vmatpush1.bf16.msra.mxu0 %v165
    %187 = vmatprep.subr.bf16.mxu0 0
    %188 = vmatpush1.bf16.msra.mxu0 %v164
    %189 = vmatprep.subr.bf16.mxu0 0
    %190 = vmatpush1.bf16.msra.mxu0 %v163
    %191 = vmatprep.subr.bf16.mxu0 0
    %192 = vmatpush2.bf16.msra.mxu0 0
    %193 = vmatprep.subr.bf16.mxu0 0
    %194 = vmatpush2.bf16.msra.mxu0 0
    %195 = vmatprep.subr.bf16.mxu0 0
    %196 = vmatpush2.bf16.msra.mxu0 0
    %197 = vmatprep.subr.bf16.mxu0 0
    %198 = vmatpush2.bf16.msra.mxu0 0
    %199 = vmatprep.subr.bf16.mxu0 0
    %200 = vmatpush2.bf16.msra.mxu0 0
    %201 = vmatprep.subr.bf16.mxu0 0
    %202 = vmatpush2.bf16.msra.mxu0 0
    %203 = vmatprep.subr.bf16.mxu0 0
    %204 = vmatpush2.bf16.msra.mxu0 0
    %205 = vmatprep.subr.bf16.mxu0 0
    %206 = vmatpush2.bf16.msra.mxu0 0
    %207 = vmatprep.mubr.bf16.mxu0 0
    %208 = vmatmul.mubr.bf16.gmra.mxu0 %v173
    %v209 = vpop.f32.mrf.mxu0
    %v210 = vadd.f32 %v145, %v209
    %v211 = vpop.f32.mrf.mxu0
    %v212 = vpop.f32.mrf.mxu0
    %v213 = vpop.f32.mrf.mxu0
    %214 = vdwg.mxu0
    %215 = vst [vmem:[#allocation8] sm:$0xff] %v210
    // Predicated region
    $region34: #{tpu_custom_call.1} parent=1 // pred_check
      _
    $region35: #{tpu_custom_call.1} parent=1 // pred_check_branch
      %217 = sbr.rel (0) target = $region37
    $region36: #{tpu_custom_call.1} parent=1 // pred_region
      %s219 = ssub.s32 128, 128
      %220 = vsyncadd [#allocation4], %s219
      %s222 = sshll.u32 [#allocation8], 4
      %s223 = int_to_ptr.vmem [resolvable:$true] %s222
      %225 = dma.vmem_to_hbm [thread:$0]  %s223, 128, %s5, [#allocation4]
    $region37: #{tpu_custom_call.1} parent=1 // pred_fallthru
      _
    // Predicated region
    $region38: #{tpu_custom_call.1} parent=1 // pred_check
      _
    $region39: #{tpu_custom_call.1} parent=1 // pred_check_branch
      %227 = sbr.rel (0) target = $region41
    $region40: #{tpu_custom_call.1} parent=1 // pred_region
      %228 = dma.done [#allocation4], 128
    $region41: #{tpu_custom_call.1} parent=1 // pred_fallthru
      _
    %229 = vsyncpa [#allocation3], 1
    %230 = vsyncpa [#allocation6], 1
    %231 = vsyncpa [#allocation4], 1

</llo_original>
